<compile_context>
chip_gen: v6e
topology: v6e:2x2x1
jax: 0.10.0
libtpu: 0.0.40
codegen_flags: <defaults>
</compile_context>

<pallas_src>
import jax
import jax.numpy as jnp
from jax.experimental import pallas as pl
from jax.experimental.pallas import tpu as pltpu

_LANES = 128
_DEFAULT_TILE_BYTES = 2 << 20      # ~2 MiB per-array block
_DEFAULT_MIN_CHUNK_BYTES = 256 << 10  # per-channel strided DMA chunk target
_VMEM_SIZING_BUDGET = 36 << 20     # pipeline-footprint cap used to bound r_tile
_VMEM_LIMIT_FLOOR = 16 << 20       # safe everywhere (v5e default scoped VMEM)
_VMEM_LIMIT_CAP = 48 << 20         # stay well inside v7x's 64 MiB/TC


def mse_sum_loss_kernel(y_pred_ref, y_true_ref, y_w_ref, out_ref):
    # Block view: (1, C, r_tile, 128) — C is an outer axis, (r_tile, 128)
    # maps onto (sublane, lane).
    yp = y_pred_ref[...].astype(jnp.float32)
    yt = y_true_ref[...].astype(jnp.float32)
    yw = y_w_ref[...].astype(jnp.float32)

    d = yp - yt
    sq_err = d * d                                    # single VPU multiply

    # max over channel dim: elementwise VPU maximum across C per-channel vregs
    w_max = jnp.max(yw, axis=1, keepdims=True)        # (1, 1, r_tile, 128)
    mask = jnp.clip(yw, 0.0, 1.0)                     # clamp(y_weights, 0, 1)
    scale = w_max * mask                              # one combined scale

    out_ref[...] = (sq_err * scale).astype(out_ref.dtype)


def _sublane_multiple(itemsize):
    # 8 rows for 32-bit, 16 for bf16/fp16, 32 for int8/fp8 (packed sublanes).
    return max(8, 32 // itemsize)


def mse_sum_loss(y_pred, y_true, y_weights, *,
                 tile_bytes=_DEFAULT_TILE_BYTES,
                 min_chunk_bytes=_DEFAULT_MIN_CHUNK_BYTES,
                 vmem_limit_bytes=None):
    assert y_pred.shape == y_true.shape == y_weights.shape
    N, C, H, W = y_pred.shape
    S = H * W
    dtype = jnp.dtype(y_pred.dtype)
    itemsize = dtype.itemsize
    sub = _sublane_multiple(itemsize)

    # Rows of 128 lanes needed to cover the spatial extent.
    R = pl.cdiv(S, _LANES)
    S_pad = R * _LANES

    # --- row-tile sizing -----------------------------------------------------
    # (a) rows from the total per-array block budget,
    # (b) rows keeping each per-channel strided DMA chunk in the large-transfer
    #     regime (>= min_chunk_bytes),
    # (c) a hard cap so 2-buffer x 4-array blocks plus f32 upcast temporaries
    #     fit the VMEM sizing budget even for very large C (fixes the old
    #     unconditional max(8, ...) floor blowing the budget).
    r_from_total = tile_bytes // (C * _LANES * itemsize)
    r_from_chunk = min_chunk_bytes // (_LANES * itemsize)
    bytes_per_row = C * _LANES * (8 * itemsize + 4 * 4)   # 8x input + ~4x f32 temps
    r_cap = _VMEM_SIZING_BUDGET // bytes_per_row

    r_tile = min(max(r_from_total, r_from_chunk), r_cap)
    r_tile = max(sub, (r_tile // sub) * sub)              # sublane-pack multiple
    if r_tile >= R:
        r_tile = R                                        # full dim always allowed

    # Ragged last block is handled by Pallas (masked writeback) — no row padding.
    grid = (N, pl.cdiv(R, r_tile))

    def prep(x):
        x = x.reshape(N, C, S)
        if S_pad != S:
            # TODO(synk): handle the <128-lane spatial tail in-kernel with a
            # masked pltpu.store instead of this one zero-pad pass.
            x = jnp.pad(x, ((0, 0), (0, 0), (0, S_pad - S)))
        return x.reshape(N, C, R, _LANES)

    blk = (1, C, r_tile, _LANES)
    idx = lambda n, r: (n, 0, r, 0)

    if vmem_limit_bytes is None:
        block_in = C * r_tile * _LANES * itemsize
        block_f32 = C * r_tile * _LANES * 4
        est = 8 * block_in + 4 * block_f32 + (2 << 20)
        vmem_limit_bytes = int(min(_VMEM_LIMIT_CAP, max(_VMEM_LIMIT_FLOOR, est)))

    out = pl.pallas_call(
        mse_sum_loss_kernel,
        out_shape=jax.ShapeDtypeStruct((N, C, R, _LANES), y_pred.dtype),
        grid_spec=pltpu.PrefetchScalarGridSpec(
            num_scalar_prefetch=0,
            grid=grid,
            in_specs=[
                pl.BlockSpec(blk, idx),
                pl.BlockSpec(blk, idx),
                pl.BlockSpec(blk, idx),
            ],
            out_specs=pl.BlockSpec(blk, idx),
        ),
        compiler_params=pltpu.CompilerParams(
            # Every output block is independent -> both grid axes parallel
            # (lets v7x shard tiles across its 2 TensorCores).
            dimension_semantics=("parallel", "parallel"),
            vmem_limit_bytes=vmem_limit_bytes,
        ),
    )(prep(y_pred), prep(y_true), prep(y_weights))

    out = out.reshape(N, C, S_pad)
    if S_pad != S:
        out = out[:, :, :S]
    return out.reshape(N, C, H, W)


def mse_sum_loss_ref(y_pred, y_true, y_weights):
    mask = jnp.clip(y_weights, 0.0, 1.0)
    out = (y_pred - y_true) ** 2.0
    return out * jnp.max(y_weights, axis=1, keepdims=True) * mask


def _make_inputs(key, shape, dtype=jnp.float32):
    k1, k2, k3 = jax.random.split(key, 3)
    y_pred = jax.random.normal(k1, shape, dtype=dtype)
    y_true = jax.random.normal(k2, shape, dtype=dtype)
    # weights spanning negative / >1 values to exercise the clamp
    y_weights = jax.random.uniform(k3, shape, dtype=dtype, minval=-0.5, maxval=1.5)
    return y_pred, y_true, y_weights


if __name__ == "__main__":
    key = jax.random.PRNGKey(0)
    k_main, k_tail, k_ragged = jax.random.split(key, 3)

    # Primary small-shape check (S % 128 == 0 -> pure reshape, no pad/slice).
    N, C, H, W = 2, 4, 16, 16
    yp, yt, yw = _make_inputs(k_main, (N, C, H, W))
    out = jax.block_until_ready(mse_sum_loss(yp, yt, yw))
    ref = mse_sum_loss_ref(yp, yt, yw)
    assert out.shape == (N, C, H, W)
    assert jnp.allclose(out, ref, atol=1e-5, rtol=1e-5)

    # Spatial-tail path (S % 128 != 0 -> single zero-pad + slice).
    yp, yt, yw = _make_inputs(k_tail, (1, 3, 9, 13))
    out = jax.block_until_ready(mse_sum_loss(yp, yt, yw))
    assert jnp.allclose(out, mse_sum_loss_ref(yp, yt, yw), atol=1e-5, rtol=1e-5)

    # Ragged-last-block path (R % r_tile != 0, masked output writeback).
    yp, yt, yw = _make_inputs(k_ragged, (1, 3, 40, 32))    # S=1280 -> R=10
    out = jax.block_until_ready(
        mse_sum_loss(yp, yt, yw, tile_bytes=3 * 8 * _LANES * 4, min_chunk_bytes=1))
    assert jnp.allclose(out, mse_sum_loss_ref(yp, yt, yw), atol=1e-5, rtol=1e-5)

    print("KERNEL_OK")
</pallas_src>

<mosaic_0001>
module attributes {stable_mosaic.version = 11 : i64} {
  func.func @mse_sum_loss_kernel(%arg0: i32, %arg1: i32, %arg2: memref<1x4x2x128xf32, #tpu.memory_space<vmem>>, %arg3: memref<1x4x2x128xf32, #tpu.memory_space<vmem>>, %arg4: memref<1x4x2x128xf32, #tpu.memory_space<vmem>>, %arg5: memref<1x4x2x128xf32, #tpu.memory_space<vmem>>) attributes {dimension_semantics = [#tpu.dimension_semantics<parallel>, #tpu.dimension_semantics<parallel>], iteration_bounds = array<i64: 2, 1>, scalar_prefetch = 0 : i64, scratch_operands = 0 : i64, tpu.core_type = #tpu.core_type<tc>, window_params = [{transform_indices = @transform_0, window_bounds = array<i64: 1, 4, 2, 128>}, {transform_indices = @transform_1, window_bounds = array<i64: 1, 4, 2, 128>}, {transform_indices = @transform_2, window_bounds = array<i64: 1, 4, 2, 128>}, {transform_indices = @transform_3, window_bounds = array<i64: 1, 4, 2, 128>}]} {
    %c0 = arith.constant 0 : index
    %c0_0 = arith.constant 0 : index
    %c0_1 = arith.constant 0 : index
    %c0_2 = arith.constant 0 : index
    %0 = vector.load %arg2[%c0, %c0_0, %c0_1, %c0_2] : memref<1x4x2x128xf32, #tpu.memory_space<vmem>>, vector<1x4x2x128xf32>
    %c0_3 = arith.constant 0 : index
    %c0_4 = arith.constant 0 : index
    %c0_5 = arith.constant 0 : index
    %c0_6 = arith.constant 0 : index
    %1 = vector.load %arg3[%c0_3, %c0_4, %c0_5, %c0_6] : memref<1x4x2x128xf32, #tpu.memory_space<vmem>>, vector<1x4x2x128xf32>
    %c0_7 = arith.constant 0 : index
    %c0_8 = arith.constant 0 : index
    %c0_9 = arith.constant 0 : index
    %c0_10 = arith.constant 0 : index
    %2 = vector.load %arg4[%c0_7, %c0_8, %c0_9, %c0_10] : memref<1x4x2x128xf32, #tpu.memory_space<vmem>>, vector<1x4x2x128xf32>
    %3 = arith.subf %0, %1 : vector<1x4x2x128xf32>
    %4 = arith.mulf %3, %3 : vector<1x4x2x128xf32>
    %cst = arith.constant dense<0xFF800000> : vector<1x2x128xf32>
    %5 = vector.multi_reduction <maximumf>, %2, %cst [1] : vector<1x4x2x128xf32> to vector<1x2x128xf32>
    %6 = vector.shape_cast %5 : vector<1x2x128xf32> to vector<1x1x2x128xf32>
    %cst_11 = arith.constant 0.000000e+00 : f32
    %cst_12 = arith.constant 1.000000e+00 : f32
    %7 = vector.broadcast %cst_11 : f32 to vector<1x4x2x128xf32>
    %8 = arith.maximumf %7, %2 : vector<1x4x2x128xf32>
    %9 = vector.broadcast %cst_12 : f32 to vector<1x4x2x128xf32>
    %10 = arith.minimumf %9, %8 : vector<1x4x2x128xf32>
    %11 = vector.broadcast %6 : vector<1x1x2x128xf32> to vector<1x4x2x128xf32>
    %12 = arith.mulf %11, %10 : vector<1x4x2x128xf32>
    %13 = arith.mulf %4, %12 : vector<1x4x2x128xf32>
    %c0_13 = arith.constant 0 : index
    %c0_14 = arith.constant 0 : index
    %c0_15 = arith.constant 0 : index
    %c0_16 = arith.constant 0 : index
    %14 = vector.load %arg5[%c0_13, %c0_14, %c0_15, %c0_16] : memref<1x4x2x128xf32, #tpu.memory_space<vmem>>, vector<1x4x2x128xf32>
    tpu.vector_store %arg5[%c0_13, %c0_14, %c0_15, %c0_16], %13 {strides = array<i32>} : memref<1x4x2x128xf32, #tpu.memory_space<vmem>>, vector<1x4x2x128xf32>,
    return
  }
  func.func @transform_0(%arg0: i32, %arg1: i32) -> (i32, i32, i32, i32) {
    %c0_i32 = arith.constant 0 : i32
    %c0_i32_0 = arith.constant 0 : i32
    %c0_i32_1 = arith.constant 0 : i32
    return %arg0, %c0_i32, %arg1, %c0_i32_0 : i32, i32, i32, i32
  }
  func.func @transform_1(%arg0: i32, %arg1: i32) -> (i32, i32, i32, i32) {
    %c0_i32 = arith.constant 0 : i32
    %c0_i32_0 = arith.constant 0 : i32
    %c0_i32_1 = arith.constant 0 : i32
    return %arg0, %c0_i32, %arg1, %c0_i32_0 : i32, i32, i32, i32
  }
  func.func @transform_2(%arg0: i32, %arg1: i32) -> (i32, i32, i32, i32) {
    %c0_i32 = arith.constant 0 : i32
    %c0_i32_0 = arith.constant 0 : i32
    %c0_i32_1 = arith.constant 0 : i32
    return %arg0, %c0_i32, %arg1, %c0_i32_0 : i32, i32, i32, i32
  }
  func.func @transform_3(%arg0: i32, %arg1: i32) -> (i32, i32, i32, i32) {
    %c0_i32 = arith.constant 0 : i32
    %c0_i32_0 = arith.constant 0 : i32
    %c0_i32_1 = arith.constant 0 : i32
    return %arg0, %c0_i32, %arg1, %c0_i32_0 : i32, i32, i32, i32
  }
}

</mosaic_0001>

<llo_original>
// kernel: tpu_custom_call.1
$region0: #{tpu_custom_call.1}
  #allocation0 [shape = 'u32[]', space=smem, size = 0x4, offset = 0x4, fixed_abs, tag = 'smem constant byte address 0x4 - core index']
  #allocation1 [shape = 'u32[144,128]{1,0:T(1,128)}', space=vmem, size = 0x12000, scoped, tag = 'internal scratch']
  %s0 = inlined_call_operand.hbm [shape: f32[2,4,2,128], index: 0, kind: input, shape index: {}]
  %s1 = inlined_call_operand.hbm [shape: f32[2,4,2,128], index: 1, kind: input, shape index: {}]
  %s2 = inlined_call_operand.hbm [shape: f32[2,4,2,128], index: 2, kind: input, shape index: {}]
  %s3 = inlined_call_operand.hbm [shape: f32[2,4,2,128], index: 3, kind: output, shape index: {}]
  %s4 = sld [smem:[#allocation0]]
  $region57: #{tpu_custom_call.1} parent=0
    _
  %s6 = ssub.s32 1, %s4
  %s7 = scalar_select 0, %s6, %s4
  $region1: #{tpu_custom_call.1} parent=0
    #allocation2 [shape = 'u8[8192]{0}', space=vmem, size = 0x2000, scoped, tag = 'input window, operand 0']
    #allocation3 [shape = 's32[2]{0}', space=sflag, size = 0x8, scoped, tag = 'scoped memory for tpu_custom_call.1']
    #allocation4 [shape = 's32[2]{0}', space=sflag, size = 0x8, scoped, tag = 'scoped memory for tpu_custom_call.1']
    #allocation5 [shape = 'u8[8192]{0}', space=vmem, size = 0x2000, scoped, tag = 'input window, operand 1']
    #allocation6 [shape = 's32[2]{0}', space=sflag, size = 0x8, scoped, tag = 'scoped memory for tpu_custom_call.1']
    #allocation7 [shape = 'u8[8192]{0}', space=vmem, size = 0x2000, scoped, tag = 'input window, operand 2']
    #allocation8 [shape = 'u8[8192]{0}', space=vmem, size = 0x2000, scoped, tag = 'output window, operand 0']
    %8 = vsyncpa [#allocation3], 0
    %s9 = scalar_lea.sflag [#allocation3], 1
    %10 = vsyncpa %s9, 0
    %11 = vsyncpa [#allocation6], 0
    %s12 = scalar_lea.sflag [#allocation6], 1
    %13 = vsyncpa %s12, 0
    %14 = vsyncpa [#allocation4], 0
    %s15 = scalar_lea.sflag [#allocation4], 1
    %16 = vsyncpa %s15, 0
    loop: start=0, step=1, limit=4
    $region2: #{tpu_custom_call.1} parent=1 // loop_pre_header
      _
    $region3: #{tpu_custom_call.1} parent=1 // loop_header
      %s18 = sphi 0, %s22
      %p19 = scmp.ge.s32.totalorder %s18, 4
      %s25 = sphi 0, %s37
      %s26 = sphi 0, %s33
      %s27 = sphi 0, %s25
      %s28 = sphi 0, %s26
      %s29 = sphi 0, %s27
      %s30 = sphi 0, %s28
      %s42 = sphi 0, %s44
      %s45 = sphi 0, %s42
      %s46 = sphi 0, %s45
      %s62 = sphi 0, %s46
      %s70 = sphi 0, %s72
      %s73 = sphi 0, %s70
      %s74 = sphi 0, %s73
      %s90 = sphi 0, %s74
      %s98 = sphi 0, %s100
      %s101 = sphi 0, %s98
      %s102 = sphi 0, %s101
      %s118 = sphi 0, %s102
      %s126 = sphi 0, %s128
      %s129 = sphi 0, %s126
      %s130 = sphi 0, %s129
      %s146 = sphi 0, %s130
    $region4: #{tpu_custom_call.1} parent=1 // loop_header_branch
      %21 = sbr.rel (%p19) target = $region8
    $region5: #{tpu_custom_call.1} parent=1 // loop_body
      %s23 = ssub.s32 %s18, 1
      %s24 = ssub.s32 %s18, 2
      %s31 = sadd.s32 1, %s26
      %p32 = scmp.ge.s32.totalorder %s31, 1
      %s33 = scalar_select %p32, 0, %s31
      %s34 = sadd.s32 1, %s25
      %s35 = scalar_select %p32, %s34, %s25
      %p36 = scmp.ge.s32.totalorder %s35, 2
      %s37 = scalar_select %p36, 0, %s35
      %s38 = ssub.s32 %s25, %s37
      %s39 = ssub.s32 %s26, %s33
      %s40 = sor.u32 %s38, %s39
      %p41 = scmp.eq.s32.totalorder %s40, 0
      %s43 = sadd.s32 %s42, 1
      %s44 = scalar_select %p41, %s42, %s43
      %p47 = pneg %p41
      %p48 = scmp.eq.s32.totalorder %s18, 1
      %p49 = por %p47, %p48
      %p50 = scmp.ne.s32.totalorder %s42, %s45
      %p51 = scmp.eq.s32.totalorder %s18, 0
      %p52 = por %p50, %p51
      %p53 = scmp.ne.s32.totalorder %s42, %s45
      %p54 = scmp.eq.s32.totalorder %s23, 1
      %p55 = por %p53, %p54
      %p56 = scmp.ne.s32.totalorder %s45, %s46
      %p57 = scmp.eq.s32.totalorder %s23, 0
      %p58 = por %p56, %p57
      %p59 = scmp.ne.s32.totalorder %s45, %s46
      %p60 = scmp.eq.s32.totalorder %s24, 1
      %p61 = por %p59, %p60
      %p63 = scmp.ne.s32.totalorder %s46, %s62
      %p64 = scmp.eq.s32.totalorder %s24, 0
      %p65 = por %p63, %p64
      %s66 = ssub.s32 %s25, %s37
      %s67 = ssub.s32 %s26, %s33
      %s68 = sor.u32 %s66, %s67
      %p69 = scmp.eq.s32.totalorder %s68, 0
      %s71 = sadd.s32 %s70, 1
      %s72 = scalar_select %p69, %s70, %s71
      %p75 = pneg %p69
      %p76 = scmp.eq.s32.totalorder %s18, 1
      %p77 = por %p75, %p76
      %p78 = scmp.ne.s32.totalorder %s70, %s73
      %p79 = scmp.eq.s32.totalorder %s18, 0
      %p80 = por %p78, %p79
      %p81 = scmp.ne.s32.totalorder %s70, %s73
      %p82 = scmp.eq.s32.totalorder %s23, 1
      %p83 = por %p81, %p82
      %p84 = scmp.ne.s32.totalorder %s73, %s74
      %p85 = scmp.eq.s32.totalorder %s23, 0
      %p86 = por %p84, %p85
      %p87 = scmp.ne.s32.totalorder %s73, %s74
      %p88 = scmp.eq.s32.totalorder %s24, 1
      %p89 = por %p87, %p88
      %p91 = scmp.ne.s32.totalorder %s74, %s90
      %p92 = scmp.eq.s32.totalorder %s24, 0
      %p93 = por %p91, %p92
      %s94 = ssub.s32 %s25, %s37
      %s95 = ssub.s32 %s26, %s33
      %s96 = sor.u32 %s94, %s95
      %p97 = scmp.eq.s32.totalorder %s96, 0
      %s99 = sadd.s32 %s98, 1
      %s100 = scalar_select %p97, %s98, %s99
      %p103 = pneg %p97
      %p104 = scmp.eq.s32.totalorder %s18, 1
      %p105 = por %p103, %p104
      %p106 = scmp.ne.s32.totalorder %s98, %s101
      %p107 = scmp.eq.s32.totalorder %s18, 0
      %p108 = por %p106, %p107
      %p109 = scmp.ne.s32.totalorder %s98, %s101
      %p110 = scmp.eq.s32.totalorder %s23, 1
      %p111 = por %p109, %p110
      %p112 = scmp.ne.s32.totalorder %s101, %s102
      %p113 = scmp.eq.s32.totalorder %s23, 0
      %p114 = por %p112, %p113
      %p115 = scmp.ne.s32.totalorder %s101, %s102
      %p116 = scmp.eq.s32.totalorder %s24, 1
      %p117 = por %p115, %p116
      %p119 = scmp.ne.s32.totalorder %s102, %s118
      %p120 = scmp.eq.s32.totalorder %s24, 0
      %p121 = por %p119, %p120
      %s122 = ssub.s32 %s25, %s37
      %s123 = ssub.s32 %s26, %s33
      %s124 = sor.u32 %s122, %s123
      %p125 = scmp.eq.s32.totalorder %s124, 0
      %s127 = sadd.s32 %s126, 1
      %s128 = scalar_select %p125, %s126, %s127
      %p131 = pneg %p125
      %p132 = scmp.eq.s32.totalorder %s18, 1
      %p133 = por %p131, %p132
      %p134 = scmp.ne.s32.totalorder %s126, %s129
      %p135 = scmp.eq.s32.totalorder %s18, 0
      %p136 = por %p134, %p135
      %p137 = scmp.ne.s32.totalorder %s126, %s129
      %p138 = scmp.eq.s32.totalorder %s23, 1
      %p139 = por %p137, %p138
      %p140 = scmp.ne.s32.totalorder %s129, %s130
      %p141 = scmp.eq.s32.totalorder %s23, 0
      %p142 = por %p140, %p141
      %p143 = scmp.ne.s32.totalorder %s129, %s130
      %p144 = scmp.eq.s32.totalorder %s24, 1
      %p145 = por %p143, %p144
      %p147 = scmp.ne.s32.totalorder %s130, %s146
      %p148 = scmp.eq.s32.totalorder %s24, 0
      %p149 = por %p147, %p148
      %p150 = scmp.le.s32.totalorder 1, %s18
      %p151 = scmp.lt.s32.totalorder %s18, 3
      %p152 = pnand %p150, %p151
      %p153 = pneg %p152
      // Predicated region
      $region9: #{tpu_custom_call.1} parent=5 // pred_check
        _
      $region10: #{tpu_custom_call.1} parent=5 // pred_check_branch
        %155 = sbr.rel (%p152) target = $region12
      $region11: #{tpu_custom_call.1} parent=5 // pred_region
        %s156 = ssub.s32 %s18, 1
      $region12: #{tpu_custom_call.1} parent=5 // pred_fallthru
        _
      %p157 = scmp.lt.s32.totalorder %s18, 2
      // Predicated region
      $region13: #{tpu_custom_call.1} parent=5 // pred_check
        %p158 = pneg %p157
      $region14: #{tpu_custom_call.1} parent=5 // pred_check_branch
        %160 = sbr.rel (%p158) target = $region16
      $region15: #{tpu_custom_call.1} parent=5 // pred_region
        // Predicated region
        $region17: #{tpu_custom_call.1} parent=15 // pred_check
          %p161 = pneg %p52
        $region18: #{tpu_custom_call.1} parent=15 // pred_check_branch
          %163 = sbr.rel (%p161) target = $region20
        $region19: #{tpu_custom_call.1} parent=15 // pred_region
          %s164 = sand.u32 %s42, 1
          %s165 = scalar_lea.sflag [#allocation3], %s164
          %s166 = sand.u32 %s42, 1
          %s167 = smul.addr %s166, 8
          %s168 = scalar_lea.vmem [#allocation2], %s167
          %s170 = ssub.s32 128, 128
          %171 = vsyncadd %s165, %s170
          %s172 = smul.addr %s25, 4
          %s173 = sadd.s32 %s26, %s172
          %s174 = smul.addr %s173, 32
          %s175 = scalar_lea.hbm %s0, %s174
          %s176 = sshll.u32 %s168, 4
          %s177 = int_to_ptr.vmem [resolvable:$true] %s176
          %182 = dma.hbm_to_vmem [thread:$0]  %s175, 128, %s177, %s165, 32, 32, 2
        $region20: #{tpu_custom_call.1} parent=15 // pred_fallthru
          _
        // Predicated region
        $region21: #{tpu_custom_call.1} parent=15 // pred_check
          %p183 = pneg %p80
        $region22: #{tpu_custom_call.1} parent=15 // pred_check_branch
          %185 = sbr.rel (%p183) target = $region24
        $region23: #{tpu_custom_call.1} parent=15 // pred_region
          %s186 = sand.u32 %s18, 1
          %s187 = scalar_lea.sflag [#allocation6], %s186
          %s188 = sand.u32 %s70, 1
          %s189 = smul.addr %s188, 8
          %s190 = scalar_lea.vmem [#allocation5], %s189
          %s192 = ssub.s32 128, 128
          %193 = vsyncadd %s187, %s192
          %s194 = smul.addr %s25, 4
          %s195 = sadd.s32 %s26, %s194
          %s196 = smul.addr %s195, 32
          %s197 = scalar_lea.hbm %s1, %s196
          %s198 = sshll.u32 %s190, 4
          %s199 = int_to_ptr.vmem [resolvable:$true] %s198
          %204 = dma.hbm_to_vmem [thread:$0]  %s197, 128, %s199, %s187, 32, 32, 2
        $region24: #{tpu_custom_call.1} parent=15 // pred_fallthru
          _
        // Predicated region
        $region25: #{tpu_custom_call.1} parent=15 // pred_check
          %p205 = pneg %p108
        $region26: #{tpu_custom_call.1} parent=15 // pred_check_branch
          %207 = sbr.rel (%p205) target = $region28
        $region27: #{tpu_custom_call.1} parent=15 // pred_region
          %s208 = sand.u32 %s18, 1
          %s209 = scalar_lea.sflag [#allocation6], %s208
          %s210 = sand.u32 %s98, 1
          %s211 = smul.addr %s210, 8
          %s212 = scalar_lea.vmem [#allocation7], %s211
          %s214 = ssub.s32 128, 128
          %215 = vsyncadd %s209, %s214
          %s216 = smul.addr %s25, 4
          %s217 = sadd.s32 %s26, %s216
          %s218 = smul.addr %s217, 32
          %s219 = scalar_lea.hbm %s2, %s218
          %s220 = sshll.u32 %s212, 4
          %s221 = int_to_ptr.vmem [resolvable:$true] %s220
          %226 = dma.hbm_to_vmem [thread:$0]  %s219, 128, %s221, %s209, 32, 32, 2
        $region28: #{tpu_custom_call.1} parent=15 // pred_fallthru
          _
      $region16: #{tpu_custom_call.1} parent=5 // pred_fallthru
        _
      %p227 = scmp.le.s32.totalorder 1, %s18
      %p228 = scmp.lt.s32.totalorder %s18, 3
      %p229 = pnand %p227, %p228
      %p230 = pneg %p229
      // Predicated region
      $region29: #{tpu_custom_call.1} parent=5 // pred_check
        _
      $region30: #{tpu_custom_call.1} parent=5 // pred_check_branch
        %232 = sbr.rel (%p229) target = $region32
      $region31: #{tpu_custom_call.1} parent=5 // pred_region
        %s233 = ssub.s32 %s18, 1
        %s234 = sand.u32 %s45, 1
        %s235 = scalar_lea.sflag [#allocation3], %s234
        %s236 = sand.u32 %s45, 1
        %s237 = smul.addr %s236, 8
        %s238 = scalar_lea.vmem [#allocation2], %s237
        // Predicated region
        $region33: #{tpu_custom_call.1} parent=31 // pred_check
          %p239 = pneg %p58
        $region34: #{tpu_custom_call.1} parent=31 // pred_check_branch
          %241 = sbr.rel (%p239) target = $region36
        $region35: #{tpu_custom_call.1} parent=31 // pred_region
          %242 = dma.done %s235, 128
        $region36: #{tpu_custom_call.1} parent=31 // pred_fallthru
          _
        %s243 = sand.u32 %s23, 1
        %s244 = scalar_lea.sflag [#allocation6], %s243
        %s245 = sand.u32 %s73, 1
        %s246 = smul.addr %s245, 8
        %s247 = scalar_lea.vmem [#allocation5], %s246
        // Predicated region
        $region37: #{tpu_custom_call.1} parent=31 // pred_check
          %p248 = pneg %p86
        $region38: #{tpu_custom_call.1} parent=31 // pred_check_branch
          %250 = sbr.rel (%p248) target = $region40
        $region39: #{tpu_custom_call.1} parent=31 // pred_region
          %251 = dma.done %s244, 128
        $region40: #{tpu_custom_call.1} parent=31 // pred_fallthru
          _
        %s252 = sand.u32 %s23, 1
        %s253 = scalar_lea.sflag [#allocation6], %s252
        %s254 = sand.u32 %s101, 1
        %s255 = smul.addr %s254, 8
        %s256 = scalar_lea.vmem [#allocation7], %s255
        // Predicated region
        $region41: #{tpu_custom_call.1} parent=31 // pred_check
          %p257 = pneg %p114
        $region42: #{tpu_custom_call.1} parent=31 // pred_check_branch
          %259 = sbr.rel (%p257) target = $region44
        $region43: #{tpu_custom_call.1} parent=31 // pred_region
          %260 = dma.done %s253, 128
        $region44: #{tpu_custom_call.1} parent=31 // pred_fallthru
          _
        %s261 = sand.u32 %s45, 1
        %s262 = scalar_lea.sflag [#allocation3], %s261
        %s263 = sand.u32 %s45, 1
        %s264 = smul.addr %s263, 8
        %s265 = scalar_lea.vmem [#allocation2], %s264
        %p266 = pneg %p58
        %p267 = pneg %p55
        %s268 = sand.u32 %s23, 1
        %s269 = scalar_lea.sflag [#allocation6], %s268
        %s270 = sand.u32 %s73, 1
        %s271 = smul.addr %s270, 8
        %s272 = scalar_lea.vmem [#allocation5], %s271
        %p273 = pneg %p86
        %p274 = pneg %p83
        %s275 = sand.u32 %s23, 1
        %s276 = scalar_lea.sflag [#allocation6], %s275
        %s277 = sand.u32 %s101, 1
        %s278 = smul.addr %s277, 8
        %s279 = scalar_lea.vmem [#allocation7], %s278
        %p280 = pneg %p114
        %p281 = pneg %p111
        %p282 = pneg %p142
        %p283 = pneg %p139
        %s284 = sand.u32 %s129, 1
        %s285 = scalar_lea.sflag [#allocation4], %s284
        %s286 = sand.u32 %s129, 1
        %s287 = smul.addr %s286, 8
        %s288 = scalar_lea.vmem [#allocation8], %s287
        %v289 = vld [vmem:[%s238] sm:$0x3]
        %v290 = vld [vmem:[%s238 + $0x2] sm:$0x3]
        %v291 = vld [vmem:[%s238 + $0x4] sm:$0x3]
        %v292 = vld [vmem:[%s238 + $0x6] sm:$0x3]
        %v293 = vld [vmem:[%s247] sm:$0x3]
        %v294 = vld [vmem:[%s247 + $0x2] sm:$0x3]
        %v295 = vld [vmem:[%s247 + $0x4] sm:$0x3]
        %v296 = vld [vmem:[%s247 + $0x6] sm:$0x3]
        %v297 = vld [vmem:[%s256] sm:$0x3]
        %v298 = vld [vmem:[%s256 + $0x2] sm:$0x3]
        %v299 = vld [vmem:[%s256 + $0x4] sm:$0x3]
        %v300 = vld [vmem:[%s256 + $0x6] sm:$0x3]
        %v301 = vsub.f32 %v289, %v293
        %v302 = vsub.f32 %v290, %v294
        %v303 = vsub.f32 %v291, %v295
        %v304 = vsub.f32 %v292, %v296
        %v305 = vmul.f32 %v301, %v301
        %v306 = vmul.f32 %v302, %v302
        %v307 = vmul.f32 %v303, %v303
        %v308 = vmul.f32 %v304, %v304
        %vm309 = vcmask 1041408
        %v310 = vsel %vm309, %v297, -inf
        %v311 = vsel %vm309, %v298, -inf
        %v312 = vsel %vm309, %v299, -inf
        %v313 = vsel %vm309, %v300, -inf
        %v314 = vmax.f32 %v310, %v311
        %v315 = vmax.f32 %v312, %v313
        %v316 = vmax.f32 %v314, %v315
        %v317 = vmax.f32 %v297, 0.0
        %v318 = vmax.f32 %v298, 0.0
        %v319 = vmax.f32 %v299, 0.0
        %v320 = vmax.f32 %v300, 0.0
        %v321 = vmin.f32 %v317, 1.0
        %v322 = vmin.f32 %v318, 1.0
        %v323 = vmin.f32 %v319, 1.0
        %v324 = vmin.f32 %v320, 1.0
        %v325 = vmul.f32 %v316, %v321
        %v326 = vmul.f32 %v316, %v322
        %v327 = vmul.f32 %v316, %v323
        %v328 = vmul.f32 %v316, %v324
        %v329 = vmul.f32 %v305, %v325
        %v330 = vmul.f32 %v306, %v326
        %v331 = vmul.f32 %v307, %v327
        %v332 = vmul.f32 %v308, %v328
        %333 = vst [vmem:[%s288] sm:$0x3] %v329
        %334 = vst [vmem:[%s288 + $0x2] sm:$0x3] %v330
        %335 = vst [vmem:[%s288 + $0x4] sm:$0x3] %v331
        %336 = vst [vmem:[%s288 + $0x6] sm:$0x3] %v332
        %s337 = sand.u32 %s129, 1
        %s338 = scalar_lea.sflag [#allocation4], %s337
        %s339 = sand.u32 %s129, 1
        %s340 = smul.addr %s339, 8
        %s341 = scalar_lea.vmem [#allocation8], %s340
        // Predicated region
        $region45: #{tpu_custom_call.1} parent=31 // pred_check
          %p342 = pneg %p139
        $region46: #{tpu_custom_call.1} parent=31 // pred_check_branch
          %344 = sbr.rel (%p342) target = $region48
        $region47: #{tpu_custom_call.1} parent=31 // pred_region
          %s346 = ssub.s32 128, 128
          %347 = vsyncadd %s338, %s346
          %s348 = smul.addr %s27, 4
          %s349 = sadd.s32 %s28, %s348
          %s350 = smul.addr %s349, 32
          %s351 = scalar_lea.hbm %s3, %s350
          %s352 = sshll.u32 %s341, 4
          %s353 = int_to_ptr.vmem [resolvable:$true] %s352
          %358 = dma.vmem_to_hbm [thread:$0]  %s353, 128, %s351, %s338, 32, 32, 2
        $region48: #{tpu_custom_call.1} parent=31 // pred_fallthru
          _
      $region32: #{tpu_custom_call.1} parent=5 // pred_fallthru
        _
      %p359 = scmp.le.s32.totalorder 2, %s18
      // Predicated region
      $region49: #{tpu_custom_call.1} parent=5 // pred_check
        %p360 = pneg %p359
      $region50: #{tpu_custom_call.1} parent=5 // pred_check_branch
        %362 = sbr.rel (%p360) target = $region52
      $region51: #{tpu_custom_call.1} parent=5 // pred_region
        %s363 = ssub.s32 %s18, 2
        // Predicated region
        $region53: #{tpu_custom_call.1} parent=51 // pred_check
          %p364 = pneg %p145
        $region54: #{tpu_custom_call.1} parent=51 // pred_check_branch
          %366 = sbr.rel (%p364) target = $region56
        $region55: #{tpu_custom_call.1} parent=51 // pred_region
          %s367 = sand.u32 %s130, 1
          %s368 = scalar_lea.sflag [#allocation4], %s367
          %s369 = sand.u32 %s130, 1
          %s370 = smul.addr %s369, 8
          %s371 = scalar_lea.vmem [#allocation8], %s370
          %372 = dma.done %s368, 128
        $region56: #{tpu_custom_call.1} parent=51 // pred_fallthru
          _
      $region52: #{tpu_custom_call.1} parent=5 // pred_fallthru
        _
    $region6: #{tpu_custom_call.1} parent=1 // loop_footer
      %s22 = sadd.s32 1, %s18
    $region7: #{tpu_custom_call.1} parent=1 // loop_footer_branch
      %17 = sbr.rel target = $region3
    $region8: #{tpu_custom_call.1} parent=1 // loop_exit
      _
    %373 = vsyncpa [#allocation3], 1
    %s374 = scalar_lea.sflag [#allocation3], 1
    %375 = vsyncpa %s374, 1
    %376 = vsyncpa [#allocation6], 1
    %s377 = scalar_lea.sflag [#allocation6], 1
    %378 = vsyncpa %s377, 1
    %379 = vsyncpa [#allocation4], 1
    %s380 = scalar_lea.sflag [#allocation4], 1
    %381 = vsyncpa %s380, 1

</llo_original>
